<compile_context>
chip_gen: v5e
topology: v5e:2x2
jax: 0.10.0
libtpu: 0.0.40
codegen_flags: <defaults>
</compile_context>

<pallas_src>
import jax
import jax.numpy as jnp
from jax.experimental import pallas as pl
from jax.experimental.pallas import tpu as pltpu


def _round_up(x, m):
    return ((x + m - 1) // m) * m


# ----------------------------- kernels -----------------------------


def _kernel_bulk(ids_ref, emb_ref, wt_ref, b_ref, out_ref, x_vmem):
    # ids_ref : (Np,)     int32 SMEM  -- token ids (scalar prefetch)
    # emb_ref : (V, Dp)   f32   VMEM  -- full embedding table, resident across the grid
    # wt_ref  : (Dp, TV)  bf16  VMEM  -- pre-transposed linear weight tile
    # b_ref   : (1, TV)   f32   VMEM  -- bias tile
    # out_ref : (TM, TV)  f32   VMEM  -- logits tile
    # x_vmem  : (TM, Dp)  f32   VMEM scratch -- gathered rows (cached over vocab axis j)
    i = pl.program_id(0)
    j = pl.program_id(1)
    tm = x_vmem.shape[0]

    # Gather the TM rows for this row tile once (first vocab tile), reuse for all j.
    @pl.when(j == 0)
    def _gather():
        @pl.loop(0, tm)
        def _(r):
            tok = ids_ref[i * tm + r]
            x_vmem[pl.ds(r, 1), :] = emb_ref[pl.ds(tok, 1), :]

    # nn.Linear: y = x @ W^T + b ; bf16 operands, f32 accumulation, f32 bias add.
    out_ref[...] = (
        jnp.dot(
            x_vmem[...].astype(wt_ref.dtype),
            wt_ref[...],
            preferred_element_type=jnp.float32,
        )
        + b_ref[...]
    )


def _kernel_stream(ids_ref, emb_hbm, wt_ref, b_ref, out_ref, x_vmem, sem):
    # Same as _kernel_bulk, but the embedding table stays in HBM (large vocab) and the
    # rows are gathered with per-row async copies.
    i = pl.program_id(0)
    j = pl.program_id(1)
    tm = x_vmem.shape[0]

    @pl.when(j == 0)
    def _gather():
        @pl.loop(0, tm)
        def _issue(r):
            tok = ids_ref[i * tm + r]
            pltpu.make_async_copy(
                emb_hbm.at[pl.ds(tok, 1), :], x_vmem.at[pl.ds(r, 1), :], sem.at[0]
            ).start()

        @pl.loop(0, tm)
        def _drain(r):
            # Wait descriptors only need matching sizes; every gather copy is exactly
            # (1, Dp), so each wait consumes exactly one row copy.  Keep issue/wait
            # sizes in lockstep if this ever changes.
            pltpu.make_async_copy(
                emb_hbm.at[pl.ds(0, 1), :], x_vmem.at[pl.ds(0, 1), :], sem.at[0]
            ).wait()

    out_ref[...] = (
        jnp.dot(
            x_vmem[...].astype(wt_ref.dtype),
            wt_ref[...],
            preferred_element_type=jnp.float32,
        )
        + b_ref[...]
    )


# ----------------------------- wrapper -----------------------------


def simple_transformer_forward(x_ids, embedding, weight, bias, *, force_stream=False):
    """x_ids: (B, S) int; embedding: (V, D); weight: (V, D); bias: (V,) -> (B, S, V)."""
    B, S = x_ids.shape
    V, D = embedding.shape
    N = B * S

    LANE = 128
    Dp = _round_up(D, LANE)

    # Lane-dense vocab tile: never 128; 512 when the vocab is big enough.
    if V > 256:
        Vp = _round_up(V, 512)
        TV = 512
    else:
        Vp = _round_up(V, 256)
        TV = 256

    # Row tile: as large as sensible (weight stream is re-read Np/TM times), but keep at
    # least 2 row tiles when possible so the 'parallel' row axis feeds both TCs (v7x).
    TM = min(512, _round_up(N, 8))
    Np = _round_up(N, TM)
    if Np // TM < 2 and N > 8:
        TM = max(8, _round_up((N + 1) // 2, 8))
        Np = _round_up(N, TM)

    # Bulk VMEM-resident table when it comfortably fits (double-buffer worst case).
    table_bytes = V * Dp * 4
    bulk = (not force_stream) and (2 * table_bytes <= (8 << 20))

    def vmem_need(tm, tv):
        return (
            2 * Dp * tv * 2          # bf16 weight tiles (double-buffered)
            + 2 * tv * 4             # bias tiles
            + 2 * tm * tv * 4        # f32 output tiles (double-buffered)
            + tm * Dp * 4            # gathered-rows scratch
            + (2 * table_bytes if bulk else 0)
        )

    BUDGET = 40 << 20                # safe under v7x's smaller physical VMEM
    while vmem_need(TM, TV) > BUDGET and TV > 256:
        TV //= 2
    while vmem_need(TM, TV) > BUDGET and TM > 64:
        TM = max(64, TM // 2)
        Np = _round_up(N, TM)
    vmem_limit = int(min(64 << 20, max(16 << 20, 2 * vmem_need(TM, TV))))

    # Host-side (XLA) padding / pre-transpose / dtype casts, done once.
    ids = jnp.zeros((Np,), jnp.int32).at[:N].set(x_ids.reshape(N).astype(jnp.int32))
    if D == Dp:
        emb_p = embedding.astype(jnp.float32)        # skip re-padding copy (common case)
    else:
        emb_p = (
            jnp.zeros((V, Dp), jnp.float32).at[:, :D].set(embedding.astype(jnp.float32))
        )
    wt_p = (
        jnp.zeros((Dp, Vp), jnp.bfloat16)
        .at[:D, :V]
        .set(weight.astype(jnp.bfloat16).T)          # bf16 weight stream, pre-transposed
    )
    b_p = jnp.zeros((1, Vp), jnp.float32).at[0, :V].set(bias.astype(jnp.float32))

    grid = (Np // TM, Vp // TV)

    if bulk:
        kernel = _kernel_bulk
        emb_spec = pl.BlockSpec((V, Dp), lambda i, j, ids: (0, 0))  # resident in VMEM
        scratch = [pltpu.VMEM((TM, Dp), jnp.float32)]
    else:
        kernel = _kernel_stream
        emb_spec = pl.BlockSpec(memory_space=pl.ANY)                # table stays in HBM
        scratch = [
            pltpu.VMEM((TM, Dp), jnp.float32),
            pltpu.SemaphoreType.DMA((1,)),
        ]

    out = pl.pallas_call(
        kernel,
        out_shape=jax.ShapeDtypeStruct((Np, Vp), jnp.float32),
        grid_spec=pltpu.PrefetchScalarGridSpec(
            num_scalar_prefetch=1,                                   # ids -> SMEM
            grid=grid,
            in_specs=[
                emb_spec,
                pl.BlockSpec((Dp, TV), lambda i, j, ids: (0, j)),    # weight tile
                pl.BlockSpec((1, TV), lambda i, j, ids: (0, j)),     # bias tile
            ],
            out_specs=pl.BlockSpec((TM, TV), lambda i, j, ids: (i, j)),
            scratch_shapes=scratch,
        ),
        compiler_params=pltpu.CompilerParams(
            dimension_semantics=("parallel", "arbitrary"),
            vmem_limit_bytes=vmem_limit,
        ),
    )(ids, emb_p, wt_p, b_p)

    return out[:N, :V].reshape(B, S, V)


# ----------------------------- demo / check -----------------------------

if __name__ == "__main__":
    # Small shapes consistent with the module: batch=2, seq=8, d_model=32, vocab=32.
    B, S, D, V = 2, 8, 32, 32

    key = jax.random.PRNGKey(0)
    k_ids, k_emb, k_w, k_b = jax.random.split(key, 4)

    x_ids = jax.random.randint(k_ids, (B, S), 0, V, dtype=jnp.int32)
    # nn.Embedding init ~ N(0, 1); nn.Linear init ~ U(-1/sqrt(D), 1/sqrt(D))
    embedding = jax.random.normal(k_emb, (V, D), dtype=jnp.float32)
    bound = 1.0 / jnp.sqrt(jnp.float32(D))
    weight = jax.random.uniform(k_w, (V, D), minval=-bound, maxval=bound, dtype=jnp.float32)
    bias = jax.random.uniform(k_b, (V,), minval=-bound, maxval=bound, dtype=jnp.float32)

    # References: exact f32 module semantics, and bf16-operand/f32-accum (kernel math).
    flat_ids = x_ids.reshape(-1)
    emb_rows = jnp.take(embedding, flat_ids, axis=0)
    ref_f32 = (emb_rows @ weight.T + bias).reshape(B, S, V)
    ref_bf16 = (
        jnp.dot(
            emb_rows.astype(jnp.bfloat16),
            weight.astype(jnp.bfloat16).T,
            preferred_element_type=jnp.float32,
        )
        + bias
    ).reshape(B, S, V)

    # Bulk path (VMEM-resident table) — what small vocabularies take.
    logits = jax.block_until_ready(
        simple_transformer_forward(x_ids, embedding, weight, bias)
    )
    assert logits.shape == (B, S, V)
    assert jnp.allclose(logits, ref_bf16, atol=1e-4, rtol=1e-4)
    assert jnp.allclose(logits, ref_f32, atol=1e-1, rtol=1e-1)   # bf16-level tolerance

    # Streaming path (per-row HBM DMA gather) — what large vocabularies take.
    logits_s = jax.block_until_ready(
        simple_transformer_forward(x_ids, embedding, weight, bias, force_stream=True)
    )
    assert jnp.allclose(logits_s, ref_bf16, atol=1e-4, rtol=1e-4)

    print("KERNEL_OK")
</pallas_src>

<mosaic_0001>
module attributes {stable_mosaic.version = 11 : i64} {
  func.func @_kernel_bulk(%arg0: i32, %arg1: i32, %arg2: memref<16xi32, #tpu.memory_space<smem>>, %arg3: memref<32x128xf32, #tpu.memory_space<vmem>>, %arg4: memref<128x256xbf16, #tpu.memory_space<vmem>>, %arg5: memref<1x256xf32, #tpu.memory_space<vmem>>, %arg6: memref<8x256xf32, #tpu.memory_space<vmem>>, %arg7: memref<8x128xf32, #tpu.memory_space<vmem>>) attributes {dimension_semantics = [#tpu.dimension_semantics<parallel>, #tpu.dimension_semantics<arbitrary>], iteration_bounds = array<i64: 2, 1>, scalar_prefetch = 1 : i64, scratch_operands = 1 : i64, tpu.core_type = #tpu.core_type<tc>, window_params = [{pipeline_mode = #tpu.pipeline_mode<synchronous>, transform_indices = @transform_0, window_bounds = array<i64: 32, 128>}, {transform_indices = @transform_1, window_bounds = array<i64: 128, 256>}, {transform_indices = @transform_2, window_bounds = array<i64: 1, 256>}, {transform_indices = @transform_3, window_bounds = array<i64: 8, 256>}]} {
    %c0_i32 = arith.constant 0 : i32
    %0 = arith.cmpi eq, %arg1, %c0_i32 : i32
    %1 = arith.extui %0 : i1 to i32
    %c0_i32_0 = arith.constant 0 : i32
    %2 = arith.cmpi ne, %1, %c0_i32_0 : i32
    scf.if %2 {
      %c0_i32_8 = arith.constant 0 : i32
      %c8_i32 = arith.constant 8 : i32
      %11 = arith.addi %c0_i32_8, %c8_i32 : i32
      %c1_i32 = arith.constant 1 : i32
      scf.for %arg8 = %c0_i32_8 to %11 step %c1_i32  : i32 {
        %c1_i32_10 = arith.constant 1 : i32
        %12 = arith.muli %arg8, %c1_i32_10 : i32
        %c0_i32_11 = arith.constant 0 : i32
        %13 = arith.addi %c0_i32_11, %12 : i32
        %c8_i32_12 = arith.constant 8 : i32
        %14 = arith.muli %arg0, %c8_i32_12 : i32
        %15 = arith.addi %14, %13 : i32
        %16 = arith.index_cast %15 : i32 to index
        %17 = memref.load %arg2[%16] : memref<16xi32, #tpu.memory_space<smem>>
        %18 = arith.index_cast %17 : i32 to index
        %c0_13 = arith.constant 0 : index
        %19 = vector.load %arg3[%18, %c0_13] : memref<32x128xf32, #tpu.memory_space<vmem>>, vector<1x128xf32>
        %20 = arith.index_cast %13 : i32 to index
        %c0_14 = arith.constant 0 : index
        %21 = vector.load %arg7[%20, %c0_14] : memref<8x128xf32, #tpu.memory_space<vmem>>, vector<1x128xf32>
        tpu.vector_store %arg7[%20, %c0_14], %19 {strides = array<i32>} : memref<8x128xf32, #tpu.memory_space<vmem>>, vector<1x128xf32>,
      }
      %c8_i32_9 = arith.constant 8 : i32
    } else {
    }
    %c0 = arith.constant 0 : index
    %c0_1 = arith.constant 0 : index
    %3 = vector.load %arg7[%c0, %c0_1] : memref<8x128xf32, #tpu.memory_space<vmem>>, vector<8x128xf32>
    %4 = arith.truncf %3 : vector<8x128xf32> to vector<8x128xbf16>
    %c0_2 = arith.constant 0 : index
    %c0_3 = arith.constant 0 : index
    %5 = vector.load %arg4[%c0_2, %c0_3] : memref<128x256xbf16, #tpu.memory_space<vmem>>, vector<128x256xbf16>
    %cst = arith.constant dense<0.000000e+00> : vector<8x256xf32>
    %6 = tpu.matmul %4, %5, %cst {dimension_numbers = #tpu.dot_dimension_numbers<[1], [0], [0], [1], [0, 0, 1, 1], [], []>} : vector<8x128xbf16>, vector<128x256xbf16>, vector<8x256xf32> -> vector<8x256xf32>
    %c0_4 = arith.constant 0 : index
    %c0_5 = arith.constant 0 : index
    %7 = vector.load %arg5[%c0_4, %c0_5] : memref<1x256xf32, #tpu.memory_space<vmem>>, vector<1x256xf32>
    %8 = vector.broadcast %7 : vector<1x256xf32> to vector<8x256xf32>
    %9 = arith.addf %6, %8 : vector<8x256xf32>
    %c0_6 = arith.constant 0 : index
    %c0_7 = arith.constant 0 : index
    %10 = vector.load %arg6[%c0_6, %c0_7] : memref<8x256xf32, #tpu.memory_space<vmem>>, vector<8x256xf32>
    tpu.vector_store %arg6[%c0_6, %c0_7], %9 {strides = array<i32>} : memref<8x256xf32, #tpu.memory_space<vmem>>, vector<8x256xf32>,
    return
  }
  func.func @transform_0(%arg0: i32, %arg1: i32, %arg2: memref<16xi32, #tpu.memory_space<smem>>) -> (i32, i32) {
    %c0_i32 = arith.constant 0 : i32
    %c0_i32_0 = arith.constant 0 : i32
    %c0_i32_1 = arith.constant 0 : i32
    return %c0_i32, %c0_i32_0 : i32, i32
  }
  func.func @transform_1(%arg0: i32, %arg1: i32, %arg2: memref<16xi32, #tpu.memory_space<smem>>) -> (i32, i32) {
    %c0_i32 = arith.constant 0 : i32
    %c0_i32_0 = arith.constant 0 : i32
    return %c0_i32, %arg1 : i32, i32
  }
  func.func @transform_2(%arg0: i32, %arg1: i32, %arg2: memref<16xi32, #tpu.memory_space<smem>>) -> (i32, i32) {
    %c0_i32 = arith.constant 0 : i32
    %c0_i32_0 = arith.constant 0 : i32
    return %c0_i32, %arg1 : i32, i32
  }
  func.func @transform_3(%arg0: i32, %arg1: i32, %arg2: memref<16xi32, #tpu.memory_space<smem>>) -> (i32, i32) {
    %c0_i32 = arith.constant 0 : i32
    return %arg0, %arg1 : i32, i32
  }
}

</mosaic_0001>

<llo_original>
// kernel: tpu_custom_call.1
$region0: #{tpu_custom_call.1}
  #allocation0 [shape = 'u32[]', space=smem, size = 0x4, offset = 0x4, fixed_abs, tag = 'smem constant byte address 0x4 - core index']
  #allocation1 [shape = 'u32[72,128]{1,0:T(1,128)}', space=vmem, size = 0x9000, scoped, tag = 'internal scratch']
  #allocation2 [shape = 'f32[8,128]{1,0:T(8,128)}', space=vmem, size = 0x1000, scoped, tag = 'scratch operand']
  #allocation3 [shape = 's32[1]{0}', space=sflag, size = 0x4, scoped, tag = 'scoped memory for tpu_custom_call.1']
  #allocation4 [shape = 'u8[512]{0}', space=smem, size = 0x200, scoped, tag = 'prefetched SMEM operand 0']
  %s0 = inlined_call_operand.hbm [shape: s32[16], index: 0, kind: input, shape index: {}]
  %s1 = inlined_call_operand.hbm [shape: f32[32,128], index: 1, kind: input, shape index: {}]
  %s2 = inlined_call_operand.hbm [shape: bf16[128,256], index: 2, kind: input, shape index: {}]
  %s3 = inlined_call_operand.vmem [shape: f32[1,256], index: 3, kind: input, shape index: {}]
  %s4 = inlined_call_operand.hbm [shape: f32[16,256], index: 4, kind: output, shape index: {}]
  %s5 = sld [smem:[#allocation0]]
  $region64: #{tpu_custom_call.1} parent=0
    _
  %s7 = ssub.s32 1, %s5
  %s8 = scalar_select 0, %s7, %s5
  %s10 = sshll.u32 %s0, 4
  %s11 = int_to_ptr.hbm [resolvable:$true] %s10
  %13 = dma.hbm_to_smem %s11, 16, [#allocation4], [#allocation3]
  %15 = dma.done [#allocation3], 16
  %16 = sfence
  $region1: #{tpu_custom_call.1} parent=0
    #allocation5 [shape = 'u8[16384]{0}', space=vmem, size = 0x4000, scoped, tag = 'input window, operand 1, single buffered']
    #allocation6 [shape = 's32[2]{0}', space=sflag, size = 0x8, scoped, tag = 'scoped memory for tpu_custom_call.1']
    #allocation7 [shape = 's32[2]{0}', space=sflag, size = 0x8, scoped, tag = 'scoped memory for tpu_custom_call.1']
    #allocation8 [shape = 'u8[65536]{0}', space=vmem, size = 0x10000, scoped, tag = 'input window, operand 2, single buffered']
    #allocation9 [shape = 's32[1]{0}', space=sflag, size = 0x4, scoped, tag = 'scoped memory for tpu_custom_call.1']
    #allocation10 [shape = 'u8[16384]{0}', space=vmem, size = 0x4000, scoped, tag = 'output window, operand 0']
    %17 = vsyncpa [#allocation6], 0
    %18 = vsyncpa [#allocation9], 0
    %19 = vsyncpa [#allocation7], 0
    %s20 = scalar_lea.sflag [#allocation7], 1
    %21 = vsyncpa %s20, 0
    loop: start=0, step=1, limit=4
    $region2: #{tpu_custom_call.1} parent=1 // loop_pre_header
      _
    $region3: #{tpu_custom_call.1} parent=1 // loop_header
      %s23 = sphi 0, %s27
      %p24 = scmp.ge.s32.totalorder %s23, 4
      %s30 = sphi 0, %s42
      %s31 = sphi 0, %s38
      %s32 = sphi 0, %s30
      %s33 = sphi 0, %s31
      %s34 = sphi 0, %s32
      %s35 = sphi 0, %s33
      %s43 = sphi 0, %s43
      %s45 = sphi 0, %s43
      %s46 = sphi 0, %s45
      %s60 = sphi 0, %s46
      %s66 = sphi 0, %s68
      %s69 = sphi 0, %s66
      %s70 = sphi 0, %s69
      %s86 = sphi 0, %s70
      %s92 = sphi 0, %s94
      %s95 = sphi 0, %s92
      %s96 = sphi 0, %s95
      %s112 = sphi 0, %s96
      %s120 = sphi 0, %s122
      %s123 = sphi 0, %s120
      %s124 = sphi 0, %s123
      %s140 = sphi 0, %s124
    $region4: #{tpu_custom_call.1} parent=1 // loop_header_branch
      %26 = sbr.rel (%p24) target = $region8
    $region5: #{tpu_custom_call.1} parent=1 // loop_body
      %s28 = ssub.s32 %s23, 1
      %s29 = ssub.s32 %s23, 2
      %s36 = sadd.s32 1, %s31
      %p37 = scmp.ge.s32.totalorder %s36, 1
      %s38 = scalar_select %p37, 0, %s36
      %s39 = sadd.s32 1, %s30
      %s40 = scalar_select %p37, %s39, %s30
      %p41 = scmp.ge.s32.totalorder %s40, 2
      %s42 = scalar_select %p41, 0, %s40
      %s44 = sadd.s32 %s43, 1
      %p47 = scmp.eq.s32.totalorder %s23, 1
      %p48 = scmp.ne.s32.totalorder %s43, %s45
      %p49 = scmp.eq.s32.totalorder %s23, 0
      %p50 = por %p48, %p49
      %p51 = scmp.ne.s32.totalorder %s43, %s45
      %p52 = scmp.eq.s32.totalorder %s28, 1
      %p53 = por %p51, %p52
      %p54 = scmp.ne.s32.totalorder %s45, %s46
      %p55 = scmp.eq.s32.totalorder %s28, 0
      %p56 = por %p54, %p55
      %p57 = scmp.ne.s32.totalorder %s45, %s46
      %p58 = scmp.eq.s32.totalorder %s29, 1
      %p59 = por %p57, %p58
      %p61 = scmp.ne.s32.totalorder %s46, %s60
      %p62 = scmp.eq.s32.totalorder %s29, 0
      %p63 = por %p61, %p62
      %s64 = ssub.s32 %s31, %s38
      %p65 = scmp.eq.s32.totalorder %s64, 0
      %s67 = sadd.s32 %s66, 1
      %s68 = scalar_select %p65, %s66, %s67
      %p71 = pneg %p65
      %p72 = scmp.eq.s32.totalorder %s23, 1
      %p73 = por %p71, %p72
      %p74 = scmp.ne.s32.totalorder %s66, %s69
      %p75 = scmp.eq.s32.totalorder %s23, 0
      %p76 = por %p74, %p75
      %p77 = scmp.ne.s32.totalorder %s66, %s69
      %p78 = scmp.eq.s32.totalorder %s28, 1
      %p79 = por %p77, %p78
      %p80 = scmp.ne.s32.totalorder %s69, %s70
      %p81 = scmp.eq.s32.totalorder %s28, 0
      %p82 = por %p80, %p81
      %p83 = scmp.ne.s32.totalorder %s69, %s70
      %p84 = scmp.eq.s32.totalorder %s29, 1
      %p85 = por %p83, %p84
      %p87 = scmp.ne.s32.totalorder %s70, %s86
      %p88 = scmp.eq.s32.totalorder %s29, 0
      %p89 = por %p87, %p88
      %s90 = ssub.s32 %s31, %s38
      %p91 = scmp.eq.s32.totalorder %s90, 0
      %s93 = sadd.s32 %s92, 1
      %s94 = scalar_select %p91, %s92, %s93
      %p97 = pneg %p91
      %p98 = scmp.eq.s32.totalorder %s23, 1
      %p99 = por %p97, %p98
      %p100 = scmp.ne.s32.totalorder %s92, %s95
      %p101 = scmp.eq.s32.totalorder %s23, 0
      %p102 = por %p100, %p101
      %p103 = scmp.ne.s32.totalorder %s92, %s95
      %p104 = scmp.eq.s32.totalorder %s28, 1
      %p105 = por %p103, %p104
      %p106 = scmp.ne.s32.totalorder %s95, %s96
      %p107 = scmp.eq.s32.totalorder %s28, 0
      %p108 = por %p106, %p107
      %p109 = scmp.ne.s32.totalorder %s95, %s96
      %p110 = scmp.eq.s32.totalorder %s29, 1
      %p111 = por %p109, %p110
      %p113 = scmp.ne.s32.totalorder %s96, %s112
      %p114 = scmp.eq.s32.totalorder %s29, 0
      %p115 = por %p113, %p114
      %s116 = ssub.s32 %s30, %s42
      %s117 = ssub.s32 %s31, %s38
      %s118 = sor.u32 %s116, %s117
      %p119 = scmp.eq.s32.totalorder %s118, 0
      %s121 = sadd.s32 %s120, 1
      %s122 = scalar_select %p119, %s120, %s121
      %p125 = pneg %p119
      %p126 = scmp.eq.s32.totalorder %s23, 1
      %p127 = por %p125, %p126
      %p128 = scmp.ne.s32.totalorder %s120, %s123
      %p129 = scmp.eq.s32.totalorder %s23, 0
      %p130 = por %p128, %p129
      %p131 = scmp.ne.s32.totalorder %s120, %s123
      %p132 = scmp.eq.s32.totalorder %s28, 1
      %p133 = por %p131, %p132
      %p134 = scmp.ne.s32.totalorder %s123, %s124
      %p135 = scmp.eq.s32.totalorder %s28, 0
      %p136 = por %p134, %p135
      %p137 = scmp.ne.s32.totalorder %s123, %s124
      %p138 = scmp.eq.s32.totalorder %s29, 1
      %p139 = por %p137, %p138
      %p141 = scmp.ne.s32.totalorder %s124, %s140
      %p142 = scmp.eq.s32.totalorder %s29, 0
      %p143 = por %p141, %p142
      %p144 = scmp.le.s32.totalorder 1, %s23
      %p145 = scmp.lt.s32.totalorder %s23, 3
      %p146 = pnand %p144, %p145
      %p147 = pneg %p146
      // Predicated region
      $region9: #{tpu_custom_call.1} parent=5 // pred_check
        _
      $region10: #{tpu_custom_call.1} parent=5 // pred_check_branch
        %149 = sbr.rel (%p146) target = $region12
      $region11: #{tpu_custom_call.1} parent=5 // pred_region
        %s150 = ssub.s32 %s23, 1
        // Predicated region
        $region13: #{tpu_custom_call.1} parent=11 // pred_check
          %p151 = pneg %p56
        $region14: #{tpu_custom_call.1} parent=11 // pred_check_branch
          %153 = sbr.rel (%p151) target = $region16
        $region15: #{tpu_custom_call.1} parent=11 // pred_region
          %155 = vsyncadd [#allocation6], 0
          %s156 = sshll.u32 %s1, 4
          %s157 = int_to_ptr.hbm [resolvable:$true] %s156
          %s158 = sshll.u32 [#allocation5], 4
          %s159 = int_to_ptr.vmem [resolvable:$true] %s158
          %164 = dma.hbm_to_vmem [thread:$0]  %s157, 512, %s159, [#allocation6], 128, 128, 8
        $region16: #{tpu_custom_call.1} parent=11 // pred_fallthru
          _
        // Predicated region
        $region17: #{tpu_custom_call.1} parent=11 // pred_check
          %p165 = pneg %p82
        $region18: #{tpu_custom_call.1} parent=11 // pred_check_branch
          %167 = sbr.rel (%p165) target = $region20
        $region19: #{tpu_custom_call.1} parent=11 // pred_region
          %s168 = smul.u32 2, %s33
          %170 = vsyncadd [#allocation9], 0
          %s171 = smul.addr %s168, 4
          %s172 = scalar_lea.hbm %s2, %s171
          %s173 = sshll.u32 %s172, 4
          %s174 = int_to_ptr.hbm [resolvable:$true] %s173
          %s175 = sshll.u32 [#allocation8], 4
          %s176 = int_to_ptr.vmem [resolvable:$true] %s175
          %181 = dma.hbm_to_vmem [thread:$0]  %s174, 2048, %s176, [#allocation9], 128, 128, 8
        $region20: #{tpu_custom_call.1} parent=11 // pred_fallthru
          _
        // Predicated region
        $region21: #{tpu_custom_call.1} parent=11 // pred_check
          %p182 = pneg %p108
        $region22: #{tpu_custom_call.1} parent=11 // pred_check_branch
          %184 = sbr.rel (%p182) target = $region24
        $region23: #{tpu_custom_call.1} parent=11 // pred_region
          %s185 = smul.u32 2, %s33
          %p186 = scmp.lt.s32.totalorder %s185, 1
          %s187 = scalar_select %p186, %s185, 1
          %s188 = scalar_lea.vmem %s3, %s187
          %s189 = smul.u32 2, %s33
        $region24: #{tpu_custom_call.1} parent=11 // pred_fallthru
          _
      $region12: #{tpu_custom_call.1} parent=5 // pred_fallthru
        _
      %p190 = scmp.lt.s32.totalorder %s23, 2
      // Predicated region
      $region25: #{tpu_custom_call.1} parent=5 // pred_check
        %p191 = pneg %p190
      $region26: #{tpu_custom_call.1} parent=5 // pred_check_branch
        %193 = sbr.rel (%p191) target = $region28
      $region27: #{tpu_custom_call.1} parent=5 // pred_region
        _
      $region28: #{tpu_custom_call.1} parent=5 // pred_fallthru
        _
      %p194 = scmp.le.s32.totalorder 1, %s23
      %p195 = scmp.lt.s32.totalorder %s23, 3
      %p196 = pnand %p194, %p195
      %p197 = pneg %p196
      // Predicated region
      $region29: #{tpu_custom_call.1} parent=5 // pred_check
        _
      $region30: #{tpu_custom_call.1} parent=5 // pred_check_branch
        %199 = sbr.rel (%p196) target = $region32
      $region31: #{tpu_custom_call.1} parent=5 // pred_region
        %s200 = ssub.s32 %s23, 1
        // Predicated region
        $region33: #{tpu_custom_call.1} parent=31 // pred_check
          %p201 = pneg %p56
        $region34: #{tpu_custom_call.1} parent=31 // pred_check_branch
          %203 = sbr.rel (%p201) target = $region36
        $region35: #{tpu_custom_call.1} parent=31 // pred_region
          %205 = dma.done [#allocation6], 512
        $region36: #{tpu_custom_call.1} parent=31 // pred_fallthru
          _
        // Predicated region
        $region37: #{tpu_custom_call.1} parent=31 // pred_check
          %p206 = pneg %p82
        $region38: #{tpu_custom_call.1} parent=31 // pred_check_branch
          %208 = sbr.rel (%p206) target = $region40
        $region39: #{tpu_custom_call.1} parent=31 // pred_region
          %210 = dma.done [#allocation9], 2048
        $region40: #{tpu_custom_call.1} parent=31 // pred_fallthru
          _
        %p211 = pneg %p56
        %p212 = pneg %p53
        %p213 = pneg %p82
        %p214 = pneg %p79
        %s215 = smul.u32 2, %s33
        %p216 = scmp.lt.s32.totalorder %s215, 1
        %s217 = scalar_select %p216, %s215, 1
        %s218 = scalar_lea.vmem %s3, %s217
        %p219 = pneg %p108
        %p220 = pneg %p105
        %p221 = pneg %p136
        %p222 = pneg %p133
        %s223 = sand.u32 %s123, 1
        %s224 = scalar_lea.sflag [#allocation7], %s223
        %s225 = sand.u32 %s123, 1
        %s226 = smul.addr %s225, 16
        %s227 = scalar_lea.vmem [#allocation10], %s226
        %s228 = smul.u32 2, %s33
        %s229 = smul.u32 2, %s33
        %p230 = scmp.lt.s32.totalorder %s229, 1
        %s231 = scalar_select %p230, %s229, 1
        %s232 = scalar_lea.vmem %s3, %s231
        %s233 = smul.u32 2, %s33
        %s234 = smul.u32 2, %s33
        %p235 = scmp.eq.s32.totalorder %s33, 0
        // Predicated region
        $region41: #{tpu_custom_call.1} parent=31 // pred_check
          %p236 = pneg %p235
        $region42: #{tpu_custom_call.1} parent=31 // pred_check_branch
          %238 = sbr.rel (%p236) target = $region44
        $region43: #{tpu_custom_call.1} parent=31 // pred_region
          loop: start=0, step=1, limit=8
          $region45: #{tpu_custom_call.1} parent=43 // loop_pre_header
            _
          $region46: #{tpu_custom_call.1} parent=43 // loop_header
            %s240 = sphi 0, %s244
            %p241 = scmp.ge.s32.totalorder %s240, 8
          $region47: #{tpu_custom_call.1} parent=43 // loop_header_branch
            %243 = sbr.rel (%p241) target = $region51
          $region48: #{tpu_custom_call.1} parent=43 // loop_body
            %s245 = smul.u32 %s32, 8
            %s246 = sadd.s32 %s245, %s240
            %s247 = sld [smem:[#allocation4 + %s246]]
            %s248 = scalar_lea.vmem [#allocation5], %s247
            %v249 = vld [vmem:[%s248] sm:$0x1]
            %s250 = scalar_lea.vmem [#allocation2], %s240
            %251 = vst [vmem:[%s250] sm:$0x1] %v249
          $region49: #{tpu_custom_call.1} parent=43 // loop_footer
            %s244 = sadd.s32 1, %s240
          $region50: #{tpu_custom_call.1} parent=43 // loop_footer_branch
            %239 = sbr.rel target = $region46
          $region51: #{tpu_custom_call.1} parent=43 // loop_exit
            _
        $region44: #{tpu_custom_call.1} parent=31 // pred_fallthru
          _
        %v252 = vld [vmem:[#allocation2] sm:$0xff]
        %v253 = vpack.c.bf16 %v252, %v252
        %v254 = vld [vmem:[#allocation8] sm:$0xff]
        %v255 = vld [vmem:[#allocation8 + $0x8] sm:$0xff]
        %v256 = vld [vmem:[#allocation8 + $0x10] sm:$0xff]
        %v257 = vld [vmem:[#allocation8 + $0x18] sm:$0xff]
        %v258 = vld [vmem:[#allocation8 + $0x20] sm:$0xff]
        %v259 = vld [vmem:[#allocation8 + $0x28] sm:$0xff]
        %v260 = vld [vmem:[#allocation8 + $0x30] sm:$0xff]
        %v261 = vld [vmem:[#allocation8 + $0x38] sm:$0xff]
        %v262 = vld [vmem:[#allocation8 + $0x40] sm:$0xff]
        %v263 = vld [vmem:[#allocation8 + $0x48] sm:$0xff]
        %v264 = vld [vmem:[#allocation8 + $0x50] sm:$0xff]
        %v265 = vld [vmem:[#allocation8 + $0x58] sm:$0xff]
        %v266 = vld [vmem:[#allocation8 + $0x60] sm:$0xff]
        %v267 = vld [vmem:[#allocation8 + $0x68] sm:$0xff]
        %v268 = vld [vmem:[#allocation8 + $0x70] sm:$0xff]
        %v269 = vld [vmem:[#allocation8 + $0x78] sm:$0xff]
        %v270 = vld [vmem:[%s232] sm:$0x3]
        %v272 = vperm.slane %v270, 0
        %v273 = vperm.slane %v270, 1
        %v292 = vunpack.c.l.b16 %v254
        %v293 = vunpack.c.h.b16 %v254
        %v294 = vunpack.c.l.b16 %v255
        %v295 = vunpack.c.h.b16 %v255
        %v296 = vunpack.c.l.b16 %v256
        %v297 = vunpack.c.h.b16 %v256
        %v298 = vunpack.c.l.b16 %v257
        %v299 = vunpack.c.h.b16 %v257
        %v300 = vunpack.c.l.b16 %v258
        %v301 = vunpack.c.h.b16 %v258
        %v302 = vunpack.c.l.b16 %v259
        %v303 = vunpack.c.h.b16 %v259
        %v304 = vunpack.c.l.b16 %v260
        %v305 = vunpack.c.h.b16 %v260
        %v306 = vunpack.c.l.b16 %v261
        %v307 = vunpack.c.h.b16 %v261
        %v308 = vunpack.c.l.b16 %v262
        %v309 = vunpack.c.h.b16 %v262
        %v310 = vunpack.c.l.b16 %v263
        %v311 = vunpack.c.h.b16 %v263
        %v312 = vunpack.c.l.b16 %v264
        %v313 = vunpack.c.h.b16 %v264
        %v314 = vunpack.c.l.b16 %v265
        %v315 = vunpack.c.h.b16 %v265
        %v316 = vunpack.c.l.b16 %v266
        %v317 = vunpack.c.h.b16 %v266
        %v318 = vunpack.c.l.b16 %v267
        %v319 = vunpack.c.h.b16 %v267
        %v320 = vunpack.c.l.b16 %v268
        %v321 = vunpack.c.h.b16 %v268
        %v322 = vunpack.c.l.b16 %v269
        %v323 = vunpack.c.h.b16 %v269
        %v324 = vpack.c.b16 %v294, %v292
        %v325 = vpack.c.b16 %v295, %v293
        %v326 = vpack.c.b16 %v298, %v296
        %v327 = vpack.c.b16 %v299, %v297
        %v328 = vpack.c.b16 %v302, %v300
        %v329 = vpack.c.b16 %v303, %v301
        %v330 = vpack.c.b16 %v306, %v304
        %v331 = vpack.c.b16 %v307, %v305
        %v332 = vpack.c.b16 %v310, %v308
        %v333 = vpack.c.b16 %v311, %v309
        %v334 = vpack.c.b16 %v314, %v312
        %v335 = vpack.c.b16 %v315, %v313
        %v336 = vpack.c.b16 %v318, %v316
        %v337 = vpack.c.b16 %v319, %v317
        %v338 = vpack.c.b16 %v322, %v320
        %v339 = vpack.c.b16 %v323, %v321
        %356 = vmatpush.bf16.msra.mxu0 %v338
        %357 = vmatpush.bf16.msra.mxu0 %v336
        %358 = vmatpush.bf16.msra.mxu0 %v334
        %359 = vmatpush.bf16.msra.mxu0 %v332
        %360 = vmatpush.bf16.msra.mxu0 %v330
        %361 = vmatpush.bf16.msra.mxu0 %v328
        %362 = vmatpush.bf16.msra.mxu0 %v326
        %363 = vmatpush.bf16.msra.mxu0 %v324
        %364 = vmatmul.bf16.gmra.mxu0 %v253
        %v365 = vpop.f32.mrf.mxu0
        %v366 = vadd.f32 %v272, %v365
        %v367 = vpop.f32.mrf.mxu0
        %368 = vdwg.mxu0
        %369 = vmatpush.bf16.msra.mxu0 %v339
        %370 = vmatpush.bf16.msra.mxu0 %v337
        %371 = vmatpush.bf16.msra.mxu0 %v335
        %372 = vmatpush.bf16.msra.mxu0 %v333
        %373 = vmatpush.bf16.msra.mxu0 %v331
        %374 = vmatpush.bf16.msra.mxu0 %v329
        %375 = vmatpush.bf16.msra.mxu0 %v327
        %376 = vmatpush.bf16.msra.mxu0 %v325
        %377 = vmatmul.bf16.gmra.mxu0 %v253
        %v378 = vpop.f32.mrf.mxu0
        %v379 = vadd.f32 %v273, %v378
        %v380 = vpop.f32.mrf.mxu0
        %381 = vdwg.mxu0
        %382 = vst [vmem:[%s227] sm:$0xff] %v366
        %383 = vst [vmem:[%s227 + $0x8] sm:$0xff] %v379
        %s384 = sand.u32 %s123, 1
        %s385 = scalar_lea.sflag [#allocation7], %s384
        %s386 = sand.u32 %s123, 1
        %s387 = smul.addr %s386, 16
        %s388 = scalar_lea.vmem [#allocation10], %s387
        // Predicated region
        $region52: #{tpu_custom_call.1} parent=31 // pred_check
          %p389 = pneg %p133
        $region53: #{tpu_custom_call.1} parent=31 // pred_check_branch
          %391 = sbr.rel (%p389) target = $region55
        $region54: #{tpu_custom_call.1} parent=31 // pred_region
          %s392 = smul.u32 2, %s33
          %394 = vsyncadd %s385, 0
          %s395 = smul.addr %s32, 2
          %s396 = sadd.s32 %s392, %s395
          %s397 = smul.addr %s396, 8
          %s398 = scalar_lea.hbm %s4, %s397
          %s400 = sshll.u32 %s388, 4
          %s401 = int_to_ptr.vmem [resolvable:$true] %s400
          %s402 = sshll.u32 %s398, 4
          %s403 = int_to_ptr.hbm [resolvable:$true] %s402
          %405 = dma.vmem_to_hbm [thread:$0]  %s401, 256, %s403, %s385
        $region55: #{tpu_custom_call.1} parent=31 // pred_fallthru
          _
      $region32: #{tpu_custom_call.1} parent=5 // pred_fallthru
        _
      %p406 = scmp.le.s32.totalorder 2, %s23
      // Predicated region
      $region56: #{tpu_custom_call.1} parent=5 // pred_check
        %p407 = pneg %p406
      $region57: #{tpu_custom_call.1} parent=5 // pred_check_branch
        %409 = sbr.rel (%p407) target = $region59
      $region58: #{tpu_custom_call.1} parent=5 // pred_region
        %s410 = ssub.s32 %s23, 2
        // Predicated region
        $region60: #{tpu_custom_call.1} parent=58 // pred_check
          %p411 = pneg %p139
        $region61: #{tpu_custom_call.1} parent=58 // pred_check_branch
          %413 = sbr.rel (%p411) target = $region63
        $region62: #{tpu_custom_call.1} parent=58 // pred_region
          %s414 = sand.u32 %s124, 1
          %s415 = scalar_lea.sflag [#allocation7], %s414
          %s416 = sand.u32 %s124, 1
          %s417 = smul.addr %s416, 16
          %s418 = scalar_lea.vmem [#allocation10], %s417
          %420 = dma.done %s415, 256
        $region63: #{tpu_custom_call.1} parent=58 // pred_fallthru
          _
      $region59: #{tpu_custom_call.1} parent=5 // pred_fallthru
        _
    $region6: #{tpu_custom_call.1} parent=1 // loop_footer
      %s27 = sadd.s32 1, %s23
    $region7: #{tpu_custom_call.1} parent=1 // loop_footer_branch
      %22 = sbr.rel target = $region3
    $region8: #{tpu_custom_call.1} parent=1 // loop_exit
      _
    %421 = vsyncpa [#allocation6], 1
    %s422 = scalar_lea.sflag [#allocation6], 1
    %423 = vsyncpa %s422, 1
    %424 = vsyncpa [#allocation9], 1
    %425 = vsyncpa [#allocation7], 1
    %s426 = scalar_lea.sflag [#allocation7], 1
    %427 = vsyncpa %s426, 1

</llo_original>
